<compile_context>
chip_gen: v6e
topology: v6e:2x2x1
jax: 0.10.0
libtpu: 0.0.40
codegen_flags: <defaults>
</compile_context>

<pallas_src>
import functools
import math

import jax
import jax.numpy as jnp
from jax.experimental import pallas as pl
from jax.experimental.pallas import tpu as pltpu


def make_sinusoidal_pe(max_len, d_model, dtype=jnp.float32):
    """Deterministic buffer setup, mirrors the torch __init__ exactly."""
    position = jnp.arange(max_len, dtype=jnp.float32)[:, None]                # (max_len, 1)
    div_term = jnp.exp(
        jnp.arange(0, d_model, 2, dtype=jnp.float32) * (-math.log(10000.0) / d_model)
    )                                                                          # (d_model//2,)
    angles = position * div_term                                               # (max_len, d_model//2)
    pe = jnp.zeros((max_len, d_model), dtype=jnp.float32)
    pe = pe.at[:, 0::2].set(jnp.sin(angles))
    pe = pe.at[:, 1::2].set(jnp.cos(angles))
    return pe[:, None, :].astype(dtype)                                        # (max_len, 1, d_model)


def _pe_add_kernel(x_ref, pe_ref, o_ref, *, batch):
    # x_ref: (tS, B*D) lane-dense; pe_ref: (tS, D). Broadcast pe across the B chunks.
    pe = pe_ref[...]
    if batch > 1:
        pe = jnp.tile(pe, (1, batch))
    o_ref[...] = (x_ref[...] + pe).astype(o_ref.dtype)


def _pe_add_dropout_kernel(x_ref, pe_ref, mask_ref, o_ref, *, batch, scale):
    pe = pe_ref[...]
    if batch > 1:
        pe = jnp.tile(pe, (1, batch))
    y = x_ref[...] + pe                                   # stays in x.dtype
    keep = mask_ref[...] != 0                             # uint8 keep mask
    scale = jnp.asarray(scale, dtype=y.dtype)             # fold 1/keep_prob into the select
    o_ref[...] = jnp.where(keep, y * scale, jnp.zeros_like(y)).astype(o_ref.dtype)


def _choose_block_seq(seq_len, row_bytes, target_bytes=2 * 1024 * 1024):
    """Largest divisor of seq_len with block bytes <= ~2 MiB and sublane dim a multiple
    of 8 (or the full dim). Conservative enough for v7x's 64 MiB VMEM with 2x buffering
    of x, out and mask, while keeping the grid pipelined instead of one giant tile."""
    max_rows = max(1, target_bytes // max(int(row_bytes), 1))
    candidates = [d for d in range(1, seq_len + 1)
                  if seq_len % d == 0 and d <= max_rows and (d % 8 == 0 or d == seq_len)]
    return max(candidates) if candidates else seq_len


def positional_encoding_forward(x, pe, *, p=0.2, training=True, key=None, block_seq=None):
    """x: (S, B, D); pe: (max_len, 1, D). Returns dropout(x + pe[:S], p) like the torch module."""
    S, B, D = x.shape
    assert pe.shape[0] >= S and pe.shape[1] == 1 and pe.shape[2] == D

    apply_dropout = bool(training) and p > 0.0
    if apply_dropout and p >= 1.0:
        # torch.nn.Dropout(p=1.0) zeroes everything in training mode (avoid 1/0 scale).
        return jnp.zeros_like(x)

    # Lane-dense 2D slabs; pe cast to x.dtype so nothing promotes to f32 when x is bf16.
    x_flat = x.reshape(S, B * D)
    pe_flat = pe[:S, 0, :].astype(x.dtype)                 # (S, D)

    if block_seq is None:
        block_seq = _choose_block_seq(S, B * D * x.dtype.itemsize)
    assert S % block_seq == 0
    grid = (S // block_seq,)

    in_specs = [
        pl.BlockSpec((block_seq, B * D), lambda i: (i, 0)),   # x
        pl.BlockSpec((block_seq, D), lambda i: (i, 0)),       # pe (implements pe[:x.size(0)])
    ]
    operands = [x_flat, pe_flat]

    if apply_dropout:
        keep_prob = 1.0 - p
        if key is None:
            key = jax.random.PRNGKey(0)
        # TODO(synk): on real TPU hardware pltpu.prng_seed/prng_random_bits would build this
        # mask in-kernel with zero HBM traffic, but those primitives do not lower on the
        # CPU/interpret fallback, so the keep-mask (1 byte/elem) is generated with jax.random.
        keep = jax.random.bernoulli(key, keep_prob, (S, B * D))
        operands.append(keep.astype(jnp.uint8))
        in_specs.append(pl.BlockSpec((block_seq, B * D), lambda i: (i, 0)))
        kernel = functools.partial(_pe_add_dropout_kernel, batch=B, scale=1.0 / keep_prob)
    else:
        kernel = functools.partial(_pe_add_kernel, batch=B)

    out_flat = pl.pallas_call(
        kernel,
        out_shape=jax.ShapeDtypeStruct((S, B * D), x.dtype),
        grid=grid,
        in_specs=in_specs,
        out_specs=pl.BlockSpec((block_seq, B * D), lambda i: (i, 0)),
        compiler_params=pltpu.CompilerParams(dimension_semantics=("parallel",)),
    )(*operands)
    return out_flat.reshape(S, B, D)


if __name__ == "__main__":
    S, B, D = 8, 2, 32          # seq=8, batch=2, d_model=32
    MAX_LEN = 64
    P_DROP = 0.2

    root = jax.random.PRNGKey(0)
    kx, kdrop = jax.random.split(root)
    x = jax.random.normal(kx, (S, B, D), dtype=jnp.float32)
    pe = make_sinusoidal_pe(MAX_LEN, D)

    # training-mode forward (add + inverted dropout)
    out_train = positional_encoding_forward(x, pe, p=P_DROP, training=True, key=kdrop)
    out_train = jax.block_until_ready(out_train)

    # eval-mode forward (dropout is identity) — check against pure-JAX reference
    out_eval = positional_encoding_forward(x, pe, p=P_DROP, training=False)
    out_eval = jax.block_until_ready(out_eval)

    ref = x + pe[:S]
    assert out_train.shape == x.shape and out_train.dtype == x.dtype
    assert jnp.allclose(out_eval, ref, atol=1e-6), "eval-mode mismatch vs reference"
    # training outputs are either 0 (dropped) or (x+pe)/keep_prob (kept, inverted dropout)
    scaled = ref / (1.0 - P_DROP)
    ok = jnp.isclose(out_train, 0.0, atol=1e-6) | jnp.isclose(out_train, scaled, atol=1e-5)
    assert bool(jnp.all(ok)), "training-mode dropout values inconsistent"

    print("KERNEL_OK")
</pallas_src>

<mosaic_0001>
module attributes {stable_mosaic.version = 11 : i64} {
  func.func @_pe_add_dropout_kernel(%arg0: i32, %arg1: memref<8x64xf32, #tpu.memory_space<vmem>>, %arg2: memref<8x32xf32, #tpu.memory_space<vmem>>, %arg3: memref<8x64xi8, #tpu.memory_space<vmem>>, %arg4: memref<8x64xf32, #tpu.memory_space<vmem>>) attributes {dimension_semantics = [#tpu.dimension_semantics<parallel>], iteration_bounds = array<i64: 1>, scalar_prefetch = 0 : i64, scratch_operands = 0 : i64, tpu.core_type = #tpu.core_type<tc>, window_params = [{transform_indices = @transform_0, window_bounds = array<i64: 8, 64>}, {transform_indices = @transform_1, window_bounds = array<i64: 8, 32>}, {transform_indices = @transform_2, window_bounds = array<i64: 8, 64>}, {transform_indices = @transform_3, window_bounds = array<i64: 8, 64>}]} {
    %c0 = arith.constant 0 : index
    %c0_0 = arith.constant 0 : index
    %0 = vector.load %arg2[%c0, %c0_0] : memref<8x32xf32, #tpu.memory_space<vmem>>, vector<8x32xf32>
    %1 = tpu.concatenate %0, %0 in 1 : vector<8x32xf32>, vector<8x32xf32> -> vector<8x64xf32>
    %c0_1 = arith.constant 0 : index
    %c0_2 = arith.constant 0 : index
    %2 = vector.load %arg1[%c0_1, %c0_2] : memref<8x64xf32, #tpu.memory_space<vmem>>, vector<8x64xf32>
    %3 = arith.addf %2, %1 : vector<8x64xf32>
    %c0_3 = arith.constant 0 : index
    %c0_4 = arith.constant 0 : index
    %4 = vector.load %arg3[%c0_3, %c0_4] : memref<8x64xi8, #tpu.memory_space<vmem>>, vector<8x64xi8>
    %c0_i8 = arith.constant 0 : i8
    %5 = vector.broadcast %c0_i8 : i8 to vector<8x64xi8>
    %6 = arith.cmpi ne, %4, %5 : vector<8x64xi8>
    %cst = arith.constant 1.250000e+00 : f32
    %7 = vector.broadcast %cst : f32 to vector<8x64xf32>
    %8 = arith.mulf %3, %7 : vector<8x64xf32>
    %cst_5 = arith.constant 0.000000e+00 : f32
    %9 = vector.broadcast %cst_5 : f32 to vector<8x64xf32>
    %10 = arith.select %6, %8, %9 : vector<8x64xi1>, vector<8x64xf32>
    %c0_6 = arith.constant 0 : index
    %c0_7 = arith.constant 0 : index
    %11 = vector.load %arg4[%c0_6, %c0_7] : memref<8x64xf32, #tpu.memory_space<vmem>>, vector<8x64xf32>
    tpu.vector_store %arg4[%c0_6, %c0_7], %10 {strides = array<i32>} : memref<8x64xf32, #tpu.memory_space<vmem>>, vector<8x64xf32>,
    return
  }
  func.func @transform_0(%arg0: i32) -> (i32, i32) {
    %c0_i32 = arith.constant 0 : i32
    %c0_i32_0 = arith.constant 0 : i32
    return %arg0, %c0_i32 : i32, i32
  }
  func.func @transform_1(%arg0: i32) -> (i32, i32) {
    %c0_i32 = arith.constant 0 : i32
    %c0_i32_0 = arith.constant 0 : i32
    return %arg0, %c0_i32 : i32, i32
  }
  func.func @transform_2(%arg0: i32) -> (i32, i32) {
    %c0_i32 = arith.constant 0 : i32
    %c0_i32_0 = arith.constant 0 : i32
    return %arg0, %c0_i32 : i32, i32
  }
  func.func @transform_3(%arg0: i32) -> (i32, i32) {
    %c0_i32 = arith.constant 0 : i32
    %c0_i32_0 = arith.constant 0 : i32
    return %arg0, %c0_i32 : i32, i32
  }
}

</mosaic_0001>

<llo_original>
// kernel: tpu_custom_call.1
$region0: #{tpu_custom_call.1}
  #allocation0 [shape = 'u32[]', space=smem, size = 0x4, offset = 0x4, fixed_abs, tag = 'smem constant byte address 0x4 - core index']
  #allocation1 [shape = 'u32[144,128]{1,0:T(1,128)}', space=vmem, size = 0x12000, scoped, tag = 'internal scratch']
  %s0 = inlined_call_operand.hbm [shape: f32[8,64], index: 0, kind: input, shape index: {}]
  %s1 = inlined_call_operand.hbm [shape: f32[8,32], index: 1, kind: input, shape index: {}]
  %s2 = inlined_call_operand.vmem [shape: u8[8,64], index: 2, kind: input, shape index: {}]
  %s3 = inlined_call_operand.hbm [shape: f32[8,64], index: 3, kind: output, shape index: {}]
  %s4 = sld [smem:[#allocation0]]
  $region30: #{tpu_custom_call.1} parent=0
    _
  %s6 = ssub.s32 1, %s4
  %s7 = scalar_select 0, %s6, %s4
  $region1: #{tpu_custom_call.1} parent=0
    #allocation2 [shape = 'u8[4096]{0}', space=vmem, size = 0x1000, scoped, tag = 'input window, operand 0, single buffered']
    #allocation3 [shape = 's32[1]{0}', space=sflag, size = 0x4, scoped, tag = 'scoped memory for tpu_custom_call.1']
    #allocation4 [shape = 's32[1]{0}', space=sflag, size = 0x4, scoped, tag = 'scoped memory for tpu_custom_call.1']
    #allocation5 [shape = 'u8[4096]{0}', space=vmem, size = 0x1000, scoped, tag = 'input window, operand 1, single buffered']
    #allocation6 [shape = 's32[1]{0}', space=sflag, size = 0x4, scoped, tag = 'scoped memory for tpu_custom_call.1']
    #allocation7 [shape = 'u8[4096]{0}', space=vmem, size = 0x1000, scoped, tag = 'output window, operand 0, single buffered']
    %8 = vsyncpa [#allocation3], 0
    %9 = vsyncpa [#allocation6], 0
    %10 = vsyncpa [#allocation4], 0
    // Predicated region
    $region2: #{tpu_custom_call.1} parent=1 // pred_check
      _
    $region3: #{tpu_custom_call.1} parent=1 // pred_check_branch
      %12 = sbr.rel (0) target = $region5
    $region4: #{tpu_custom_call.1} parent=1 // pred_region
      %s14 = ssub.s32 128, 128
      %15 = vsyncadd [#allocation3], %s14
      %s17 = sshll.u32 [#allocation2], 4
      %s18 = int_to_ptr.vmem [resolvable:$true] %s17
      %20 = dma.hbm_to_vmem [thread:$0]  %s0, 128, %s18, [#allocation3]
    $region5: #{tpu_custom_call.1} parent=1 // pred_fallthru
      _
    // Predicated region
    $region6: #{tpu_custom_call.1} parent=1 // pred_check
      _
    $region7: #{tpu_custom_call.1} parent=1 // pred_check_branch
      %22 = sbr.rel (0) target = $region9
    $region8: #{tpu_custom_call.1} parent=1 // pred_region
      %s24 = ssub.s32 128, 128
      %25 = vsyncadd [#allocation6], %s24
      %s27 = sshll.u32 [#allocation5], 4
      %s28 = int_to_ptr.vmem [resolvable:$true] %s27
      %30 = dma.hbm_to_vmem [thread:$0]  %s1, 128, %s28, [#allocation6]
    $region9: #{tpu_custom_call.1} parent=1 // pred_fallthru
      _
    // Predicated region
    $region10: #{tpu_custom_call.1} parent=1 // pred_check
      _
    $region11: #{tpu_custom_call.1} parent=1 // pred_check_branch
      %32 = sbr.rel (0) target = $region13
    $region12: #{tpu_custom_call.1} parent=1 // pred_region
      _
    $region13: #{tpu_custom_call.1} parent=1 // pred_fallthru
      _
    // Predicated region
    $region14: #{tpu_custom_call.1} parent=1 // pred_check
      _
    $region15: #{tpu_custom_call.1} parent=1 // pred_check_branch
      %34 = sbr.rel (0) target = $region17
    $region16: #{tpu_custom_call.1} parent=1 // pred_region
      %35 = dma.done [#allocation3], 128
    $region17: #{tpu_custom_call.1} parent=1 // pred_fallthru
      _
    // Predicated region
    $region18: #{tpu_custom_call.1} parent=1 // pred_check
      _
    $region19: #{tpu_custom_call.1} parent=1 // pred_check_branch
      %37 = sbr.rel (0) target = $region21
    $region20: #{tpu_custom_call.1} parent=1 // pred_region
      %38 = dma.done [#allocation6], 128
    $region21: #{tpu_custom_call.1} parent=1 // pred_fallthru
      _
    %v41 = vld [vmem:[#allocation5] sm:$0xff]
    %43 = vrot.lane.b32.xlu0 %v41, 32
    %v44 = vpop.permute.xlu0 %43
    %vm46 = vcmask 261120
    %v47 = vsel %vm46, %v41, %v44
    %v48 = vld [vmem:[#allocation2] sm:$0xff]
    %v49 = vadd.f32 %v48, %v47
    %v50 = vld [vmem:[%s2] sm:$0x3]
    %vm51 = vnez %v50
    %v52 = vmul.f32 %v49, 1.25
    %v53 = vsel %vm51, 16843009, 0
    %v54 = vunpack.c.0.s8 %v53
    %vm55 = vcmp.ne.s32.totalorder %v54, 0
    %v56 = vsel %vm55, %v52, 0.0
    %vm57 = vcmask 523264
    %58 = vst.msk [vmem:[#allocation7] sm:$0xff] %vm57, %v56
    // Predicated region
    $region22: #{tpu_custom_call.1} parent=1 // pred_check
      _
    $region23: #{tpu_custom_call.1} parent=1 // pred_check_branch
      %60 = sbr.rel (0) target = $region25
    $region24: #{tpu_custom_call.1} parent=1 // pred_region
      %s62 = ssub.s32 128, 128
      %63 = vsyncadd [#allocation4], %s62
      %s65 = sshll.u32 [#allocation7], 4
      %s66 = int_to_ptr.vmem [resolvable:$true] %s65
      %68 = dma.vmem_to_hbm [thread:$0]  %s66, 128, %s3, [#allocation4]
    $region25: #{tpu_custom_call.1} parent=1 // pred_fallthru
      _
    // Predicated region
    $region26: #{tpu_custom_call.1} parent=1 // pred_check
      _
    $region27: #{tpu_custom_call.1} parent=1 // pred_check_branch
      %70 = sbr.rel (0) target = $region29
    $region28: #{tpu_custom_call.1} parent=1 // pred_region
      %71 = dma.done [#allocation4], 128
    $region29: #{tpu_custom_call.1} parent=1 // pred_fallthru
      _
    %72 = vsyncpa [#allocation3], 1
    %73 = vsyncpa [#allocation6], 1
    %74 = vsyncpa [#allocation4], 1

</llo_original>
